<compile_context>
chip_gen: v7x
topology: tpu7x:2x2x1
jax: 0.10.0
libtpu: 0.0.40
codegen_flags: <defaults>
</compile_context>

<pallas_src>
import functools

import jax
import jax.numpy as jnp
from jax.experimental import pallas as pl
from jax.experimental.pallas import tpu as pltpu

VMEM = pltpu.MemorySpace.VMEM

CIN_PAD = 8      # input channels padded 3 -> 8 for an aligned matmul contraction
P_OUT = 7        # 7x7 ROI bins
PP = P_OUT * P_OUT
PP_PAD = 64      # lane-padded bins per box (columns 49..63 are dead/sentinel)

_CFG = None


def _round_up(x, m):
    return ((x + m - 1) // m) * m


def _hw_config():
    """Generation-dependent VMEM budget and tile sizes (v5e/v6e: 128 MiB VMEM,
    v7x: 64 MiB)."""
    global _CFG
    if _CFG is None:
        try:
            vmem_bytes = int(pltpu.get_tpu_info().vmem_capacity_bytes)
        except Exception:
            vmem_bytes = 64 * 1024 * 1024        # conservative fallback
        if vmem_bytes > (64 << 20):              # v5e / v6e class
            _CFG = dict(vmem_limit=96 << 20, roi_tk=8192,
                        conv_tile=16384, cor_tile=8192)
        else:                                    # v7x class
            _CFG = dict(vmem_limit=48 << 20, roi_tk=4096,
                        conv_tile=8192, cor_tile=4096)
    return _CFG


def _grid_params(dims):
    return pltpu.CompilerParams(dimension_semantics=dims,
                                vmem_limit_bytes=_hw_config()["vmem_limit"])


def _vmem_specs(n):
    return [pl.BlockSpec(memory_space=VMEM) for _ in range(n)]


# ----------------------------------------------------------------------------
# Pallas kernels
# ----------------------------------------------------------------------------
def _proj_kernel(x_ref, w_ref, o_ref):
    # x: (1, CIN_PAD, thw) bf16 ; w: (Cout, CIN_PAD) bf16 (pre-cast) -> bf16 out
    o_ref[0] = jnp.dot(w_ref[...], x_ref[0],
                       preferred_element_type=jnp.float32).astype(o_ref.dtype)


def _roi_kernel(colp_ref, feat_ref, sel_ref, slab_ref, pooled_ref, acc_ref, *,
                tk, level_dims):
    """One image, one HWt tile: regenerate the bilinear weight tile on the VPU
    from the per-box column params and accumulate the MXU matmul into VMEM."""
    k = pl.program_id(1)

    @pl.when(k == 0)
    def _():
        acc_ref[...] = jnp.zeros_like(acc_ref)

    # --- row coordinates of this HWt tile: (global y incl. level offset, x) ---
    hw = k * tk + jax.lax.broadcasted_iota(jnp.int32, (tk, 1), 0)
    gy = jnp.full_like(hw, -1)
    xx = jnp.full_like(hw, -1)
    off, yoff = 0, 0
    for (Hl, Wl) in level_dims:                       # static, unrolled
        in_lvl = (hw >= off) & (hw < off + Hl * Wl)
        local = jnp.clip(hw - off, 0, Hl * Wl - 1)
        gy = jnp.where(in_lvl, yoff + local // Wl, gy)
        xx = jnp.where(in_lvl, local % Wl, xx)
        off += Hl * Wl
        yoff += Hl
    gyf = gy.astype(jnp.float32)
    xxf = xx.astype(jnp.float32)

    # --- per-(box, bin) column params (8, NBPP): gp0y, gp1y, fy, p0x, p1x, fx ---
    colp = colp_ref[0]
    gp0y, gp1y, fy = colp[0:1], colp[1:2], colp[2:3]
    p0x, p1x, fx = colp[3:4], colp[4:5], colp[5:6]

    wy = jnp.where(gyf == gp0y, 1.0 - fy, 0.0) + jnp.where(gyf == gp1y, fy, 0.0)
    wx = jnp.where(xxf == p0x, 1.0 - fx, 0.0) + jnp.where(xxf == p1x, fx, 0.0)
    w = (wy * wx).astype(jnp.bfloat16)                # (tk, NBPP)

    acc_ref[...] += jnp.dot(feat_ref[0], w, preferred_element_type=jnp.float32)

    @pl.when(k == pl.num_programs(1) - 1)
    def _():
        acc = acc_ref[...]
        slab_ref[0] = acc.astype(slab_ref.dtype)      # lane-dense bf16 ROI slab
        # fused spatial mean over the 49 valid bins (acc still in VMEM)
        pooled_ref[0] = jnp.dot(acc, sel_ref[...],
                                preferred_element_type=jnp.float32)


def _corattn_kernel(f_ref, s_ref, o_ref):
    # depthwise 1x1 correlation == per-channel scale, tiled over (B, HWt)
    o_ref[0] = (f_ref[0].astype(jnp.float32) * s_ref[0]).astype(o_ref.dtype)


def _score_kernel(x_ref, p_ref, o_ref, *, inv_sqrt_c):
    # prototype similarity + sigmoid (RCNN-head stand-in scores)
    sims = jnp.sum(x_ref[...] * p_ref[...], axis=-1, keepdims=True) * inv_sqrt_c
    o_ref[...] = jax.nn.sigmoid(sims)


def _chead_kernel(x_ref, w_ref, o_ref):
    # pooled (N, C) f32 @ (C, D) bf16 -> L2-normalized (N, D) f32
    proj = jnp.dot(x_ref[...].astype(jnp.bfloat16), w_ref[...],
                   preferred_element_type=jnp.float32)
    inv = jax.lax.rsqrt(jnp.sum(proj * proj, axis=-1, keepdims=True) + 1e-12)
    o_ref[...] = proj * inv


def _contrast_loss_kernel(q_ref, k_ref, queue_ref, o_ref, *, t):
    q = q_ref[...]
    k = k_ref[...]
    l_pos = jnp.sum(q * k, axis=-1, keepdims=True) / t
    l_neg = jnp.dot(q.astype(jnp.bfloat16),
                    queue_ref[...].astype(jnp.bfloat16),
                    preferred_element_type=jnp.float32) / t
    m = jnp.maximum(l_pos, jnp.max(l_neg, axis=-1, keepdims=True))
    s = jnp.exp(l_pos - m) + jnp.sum(jnp.exp(l_neg - m), axis=-1, keepdims=True)
    per_row = m + jnp.log(s) - l_pos
    n = q.shape[0]
    o_ref[...] = jnp.sum(per_row, axis=0, keepdims=True) / float(n)


def _ema_pair_kernel(ak_ref, aq_ref, bk_ref, bq_ref, oa_ref, ob_ref, *, m):
    oa_ref[...] = ak_ref[...] * m + aq_ref[...] * (1.0 - m)
    ob_ref[...] = bk_ref[...] * m + bq_ref[...] * (1.0 - m)


def _enqueue_kernel(ptr_ref, keys_ref, qin_ref, qout_ref, sem):
    # MoCo dequeue/enqueue: write only the bs columns at the dynamic pointer;
    # the queue stays in HBM (aliased in/out), no full-queue copy.
    del qin_ref
    bs = keys_ref.shape[1]
    cp = pltpu.make_async_copy(keys_ref,
                               qout_ref.at[:, pl.ds(ptr_ref[0], bs)], sem)
    cp.start()
    cp.wait()


# ----------------------------------------------------------------------------
# Wrappers
# ----------------------------------------------------------------------------
def conv1x1(x, w):
    """x: (B, CIN_PAD, HW) bf16 ; w: (Cout, CIN_PAD) f32 -> (B, Cout, HW) bf16."""
    B, Cin, HW = x.shape
    Cout = w.shape[0]
    wb = w.astype(jnp.bfloat16)                       # pre-cast once (wrapper)
    thw = _hw_config()["conv_tile"]
    if HW <= thw:
        thw, HWp = HW, HW
    else:
        HWp = _round_up(HW, thw)
        x = jnp.pad(x, ((0, 0), (0, 0), (0, HWp - HW)))
    y = pl.pallas_call(
        _proj_kernel,
        grid=(B, HWp // thw),
        in_specs=[pl.BlockSpec((1, Cin, thw), lambda b, j: (b, 0, j)),
                  pl.BlockSpec((Cout, Cin), lambda b, j: (0, 0))],
        out_specs=pl.BlockSpec((1, Cout, thw), lambda b, j: (b, 0, j)),
        out_shape=jax.ShapeDtypeStruct((B, Cout, HWp), jnp.bfloat16),
        compiler_params=_grid_params(("parallel", "parallel")),
    )(x, wb)
    return y if HWp == HW else y[:, :, :HW]


def corattn_all(feat_cat_q, pooled_s):
    # feat_cat_q: (B, C, HWt) bf16 ; pooled_s: (B, C) f32
    B, C, HWt = feat_cat_q.shape
    tc = _hw_config()["cor_tile"]
    if HWt <= tc:
        tc, HWp = HWt, HWt
    else:
        HWp = _round_up(HWt, tc)
        feat_cat_q = jnp.pad(feat_cat_q, ((0, 0), (0, 0), (0, HWp - HWt)))
    scale = pooled_s.reshape(B, C, 1)
    out = pl.pallas_call(
        _corattn_kernel,
        grid=(B, HWp // tc),
        in_specs=[pl.BlockSpec((1, C, tc), lambda b, j: (b, 0, j)),
                  pl.BlockSpec((1, C, 1), lambda b, j: (b, 0, 0))],
        out_specs=pl.BlockSpec((1, C, tc), lambda b, j: (b, 0, j)),
        out_shape=jax.ShapeDtypeStruct((B, C, HWp), feat_cat_q.dtype),
        compiler_params=_grid_params(("parallel", "parallel")),
    )(feat_cat_q, scale)
    return out if HWp == HWt else out[:, :, :HWt]


def fused_scores(pooled, proto, channel):
    # pooled/proto: (P, C) f32 -> (P, 1) sigmoid scores
    return pl.pallas_call(
        functools.partial(_score_kernel, inv_sqrt_c=float(channel) ** -0.5),
        out_shape=jax.ShapeDtypeStruct((pooled.shape[0], 1), jnp.float32),
        in_specs=_vmem_specs(2),
        out_specs=pl.BlockSpec(memory_space=VMEM),
    )(pooled, proto)


def contrast_head(pooled, w):
    # pooled: (N, C) f32 (already spatially pooled in the ROI kernel)
    return pl.pallas_call(
        _chead_kernel,
        out_shape=jax.ShapeDtypeStruct((pooled.shape[0], w.shape[1]),
                                       jnp.float32),
        in_specs=_vmem_specs(2),
        out_specs=pl.BlockSpec(memory_space=VMEM),
    )(pooled, w.astype(jnp.bfloat16))


def contrast_loss(q, k, queue, t):
    out = pl.pallas_call(
        functools.partial(_contrast_loss_kernel, t=t),
        out_shape=jax.ShapeDtypeStruct((1, 1), jnp.float32),
        in_specs=_vmem_specs(3),
        out_specs=pl.BlockSpec(memory_space=VMEM),
    )(q, k, queue)
    return out[0, 0]


def ema_pair(a_k, a_q, b_k, b_q, m):
    return pl.pallas_call(
        functools.partial(_ema_pair_kernel, m=m),
        out_shape=(jax.ShapeDtypeStruct(a_k.shape, a_k.dtype),
                   jax.ShapeDtypeStruct(b_k.shape, b_k.dtype)),
        in_specs=_vmem_specs(4),
        out_specs=(pl.BlockSpec(memory_space=VMEM),
                   pl.BlockSpec(memory_space=VMEM)),
    )(a_k, a_q, b_k, b_q)


def enqueue(queue, keys_t, ptr):
    # queue: (D, K) f32 (HBM, aliased in/out) ; keys_t: (D, bs) ; ptr: (1,) int32
    return pl.pallas_call(
        _enqueue_kernel,
        out_shape=jax.ShapeDtypeStruct(queue.shape, queue.dtype),
        in_specs=[pl.BlockSpec(memory_space=pltpu.MemorySpace.SMEM),  # ptr
                  pl.BlockSpec(memory_space=VMEM),                    # keys
                  pl.BlockSpec(memory_space=pl.ANY)],                 # queue
        out_specs=pl.BlockSpec(memory_space=pl.ANY),
        scratch_shapes=[pltpu.SemaphoreType.DMA],
        input_output_aliases={2: 0},       # queue (input 2) aliases the output
    )(ptr, keys_t, queue)


# ----------------------------------------------------------------------------
# ROI pooling: per-image K-tiled matmul with in-kernel bilinear weights
# ----------------------------------------------------------------------------
def map_levels(boxes, num_levels, image_size):
    # Original UP_RCNN._map_levels formula kept verbatim (spec semantics).
    scale = jnp.sqrt((boxes[:, 2] - boxes[:, 0]) * (boxes[:, 3] - boxes[:, 1]))
    levels = jnp.floor(jnp.log2(scale / (image_size[0] * image_size[1]) + 1e-6))
    return jnp.clip(levels, 0, num_levels - 1).astype(jnp.int32)


def _axis_params(lo, size, length, P):
    # TODO(synk): sampling_ratio=1, aligned=False — a stand-in, not numerically
    # identical to torchvision roi_align.
    idx = (jnp.arange(P, dtype=jnp.float32) + 0.5) / P
    pts = lo[:, None] + idx[None, :] * size[:, None]
    pts = jnp.clip(pts, 0.0, length[:, None] - 1.0)
    p0 = jnp.floor(pts)
    frac = pts - p0
    p1 = jnp.minimum(p0 + 1.0, length[:, None] - 1.0)
    return p0, p1, frac


def _box_column_params(boxes, level_dims, image_size, P=P_OUT):
    """Per-(box, bin) bilinear parameters: rows [gp0y, gp1y, fy, p0x, p1x, fx,
    0, 0], shape (8, n*PP_PAD).  The assigned FPN level is folded into a global
    y coordinate; dead columns (bins 49..63) use a never-matching sentinel."""
    n = boxes.shape[0]
    nlev = len(level_dims)
    Hs = jnp.array([float(h) for h, _ in level_dims], jnp.float32)
    Ws = jnp.array([float(w) for _, w in level_dims], jnp.float32)
    scales = jnp.array([float(w) / float(image_size[-1]) for _, w in level_dims],
                       jnp.float32)                  # width-based, as in spec
    yoff_py, acc = [], 0.0
    for h, _ in level_dims:
        yoff_py.append(acc)
        acc += float(h)
    yoffs = jnp.array(yoff_py, jnp.float32)

    lvl = map_levels(boxes, nlev, image_size)
    H, W = jnp.take(Hs, lvl), jnp.take(Ws, lvl)
    sc, yo = jnp.take(scales, lvl), jnp.take(yoffs, lvl)

    x1, y1 = boxes[:, 0] * sc, boxes[:, 1] * sc
    x2, y2 = boxes[:, 2] * sc, boxes[:, 3] * sc
    roi_w = jnp.maximum(x2 - x1, 1.0)
    roi_h = jnp.maximum(y2 - y1, 1.0)

    p0y, p1y, fy = _axis_params(y1, roi_h, H, P)     # (n, P)
    p0x, p1x, fx = _axis_params(x1, roi_w, W, P)
    gp0y, gp1y = p0y + yo[:, None], p1y + yo[:, None]

    rep = lambda a: jnp.repeat(a, P, axis=1)         # bin-row major (n, 49)
    til = lambda a: jnp.tile(a, (1, P))
    zeros = jnp.zeros((n, P * P), jnp.float32)
    params = jnp.stack([rep(gp0y), rep(gp1y), rep(fy),
                        til(p0x), til(p1x), til(fx), zeros, zeros], axis=1)
    pad = jnp.zeros((n, 8, PP_PAD - P * P), jnp.float32)
    pad = pad.at[:, 0:2, :].set(-2.0).at[:, 3:5, :].set(-2.0)
    params = jnp.concatenate([params, pad], axis=-1)          # (n, 8, PP_PAD)
    return jnp.transpose(params, (1, 0, 2)).reshape(8, n * PP_PAD)


def _image_colp(boxes, NB, level_dims, image_size):
    n = boxes.shape[0]
    p = _box_column_params(boxes, level_dims, image_size)
    if n < NB:
        pad = jnp.zeros((8, (NB - n) * PP_PAD), jnp.float32)
        pad = pad.at[0:2, :].set(-2.0).at[3:5, :].set(-2.0)
        p = jnp.concatenate([p, pad], axis=-1)
    return p


def _roi_tile(HWt, NBPP, cfg):
    # bound the in-kernel (tk, NBPP) weight temporaries (~4 MB f32 each)
    cap = max(128, ((1 << 20) // NBPP) // 128 * 128)
    tk = min(cfg["roi_tk"], cap)
    full = _round_up(HWt, 128)
    return full if full <= tk else tk


def box_roi_pool(feats, boxes_list, image_size, output_size=P_OUT, feat_cat=None):
    """Returns (list of per-image pooled (n_i, C) features, lane-dense bf16 ROI
    slab (B, C, NB*PP_PAD)).  The spatial mean is fused into the ROI kernel."""
    B, C = feats[0].shape[0], feats[0].shape[1]
    level_dims = tuple((int(f.shape[-2]), int(f.shape[-1])) for f in feats)
    num_boxes = [int(b.shape[0]) for b in boxes_list]
    NB = max(2, max(num_boxes))
    NB += NB % 2                              # even -> NBPP multiple of 128
    NBPP = NB * PP_PAD
    NB_SEL = _round_up(max(NB, 128), 128)

    # per-image per-column bilinear params — tiny (B, 8, NBPP) f32 table
    colp = jnp.stack([_image_colp(b, NB, level_dims, image_size)
                      for b in boxes_list])

    if feat_cat is None:
        feat_cat = jnp.concatenate([f.reshape(B, C, -1) for f in feats], axis=-1)
    feat_cat = feat_cat.astype(jnp.bfloat16)
    HWt = feat_cat.shape[-1]

    cfg = _hw_config()
    tk = _roi_tile(HWt, NBPP, cfg)
    HWp = _round_up(HWt, tk)
    if HWp != HWt:
        feat_cat = jnp.pad(feat_cat, ((0, 0), (0, 0), (0, HWp - HWt)))
    nk = HWp // tk

    # bin-mean selection matrix: pooled = acc @ sel  (only the 49 valid bins)
    cols = jnp.arange(NBPP)
    sel = jnp.where((cols[:, None] // PP_PAD == jnp.arange(NB_SEL)[None, :])
                    & (cols[:, None] % PP_PAD < output_size * output_size),
                    1.0 / float(output_size * output_size), 0.0
                    ).astype(jnp.float32)

    slab, pooled = pl.pallas_call(
        functools.partial(_roi_kernel, tk=tk, level_dims=level_dims),
        grid=(B, nk),
        in_specs=[pl.BlockSpec((1, 8, NBPP), lambda b, k: (b, 0, 0)),
                  pl.BlockSpec((1, C, tk), lambda b, k: (b, 0, k)),
                  pl.BlockSpec((NBPP, NB_SEL), lambda b, k: (0, 0))],
        out_specs=(pl.BlockSpec((1, C, NBPP), lambda b, k: (b, 0, 0)),
                   pl.BlockSpec((1, C, NB_SEL), lambda b, k: (b, 0, 0))),
        out_shape=(jax.ShapeDtypeStruct((B, C, NBPP), jnp.bfloat16),
                   jax.ShapeDtypeStruct((B, C, NB_SEL), jnp.float32)),
        scratch_shapes=[pltpu.VMEM((C, NBPP), jnp.float32)],
        compiler_params=_grid_params(("parallel", "arbitrary")),
    )(colp, feat_cat, sel)

    pooled = jnp.transpose(pooled[:, :, :NB], (0, 2, 1))   # (B, NB, C), tiny
    pooled_list = [pooled[i, :n] for i, n in enumerate(num_boxes)]
    return pooled_list, slab


# ----------------------------------------------------------------------------
# Model
# ----------------------------------------------------------------------------
def backbone_neck(images, w_proj, strides=(2, 4)):
    """TODO(synk): ResNet50 + FPN are external undefined modules; stand-in is
    strided average pooling + a Pallas 1x1-conv channel projection per level,
    NCHW end-to-end, bf16 feature maps."""
    B, Cin, H, W = images.shape
    feats = []
    for s in strides:
        Hl, Wl = H // s, W // s
        x = images.reshape(B, Cin, Hl, s, Wl, s).mean(axis=(3, 5))
        x = jnp.pad(x, ((0, 0), (0, CIN_PAD - Cin), (0, 0), (0, 0)))
        x = x.reshape(B, CIN_PAD, Hl * Wl).astype(jnp.bfloat16)
        y = conv1x1(x, w_proj)
        feats.append(y.reshape(B, -1, Hl, Wl))
    return feats


def rpn_standin(corattention, image_size, boxes_q):
    # TODO(synk): RPN is an external undefined module; the attention maps are
    # consumed here but the stand-in emits fixed, deterministic proposals.
    del image_size, boxes_q
    B = corattention[0].shape[0]
    return [jnp.array([[2., 2., 20., 20.], [4., 6., 28., 26.]], jnp.float32)
            for _ in range(B)]


class UPRCNNPallas:
    def __init__(self, channel=64, contrast_dim=128, K=256, m=0.999, T=0.07,
                 key=None):
        self.channel, self.contrast_dim = channel, contrast_dim
        self.K, self.m, self.T = K, m, T
        k1, k2, k3 = jax.random.split(key, 3)
        # query / key stand-in parameters (key initialized == query, as in MoCo)
        self.w_bb_q = 0.1 * jax.random.normal(k1, (channel, CIN_PAD), jnp.float32)
        self.w_bb_k = self.w_bb_q
        self.w_head_q = 0.1 * jax.random.normal(k2, (channel, contrast_dim),
                                                jnp.float32)
        self.w_head_k = self.w_head_q
        q = jax.random.normal(k3, (contrast_dim, K), jnp.float32)
        self.queue = q / jnp.linalg.norm(q, axis=0, keepdims=True)
        self.queue_ptr = jnp.zeros((1,), jnp.int32)   # device scalar: no retrace

    def forward(self, inputs, training=True):
        num_shots = len(inputs[0]['pool'])
        images_s = jnp.concatenate(
            [jnp.stack([s['image_s'] for s in inp['pool']]) for inp in inputs])
        images_q = jnp.stack([inp['image_q'] for inp in inputs])
        images_k = jnp.stack([inp['image_k'] for inp in inputs])
        boxes_s = [s['boxes_s'] for inp in inputs for s in inp['pool']]
        boxes_q = [inp['boxes_q'] for inp in inputs] if training else None
        boxes_k = [inp['boxes_k'] for inp in inputs] if training else None
        image_size = images_q.shape[-2:]
        B = images_q.shape[0]

        feats_s = backbone_neck(images_s, self.w_bb_q)
        feats_q = backbone_neck(images_q, self.w_bb_q)
        # concatenated-level feature slab, reused by ROI pooling and corattn
        featcat_q = jnp.concatenate(
            [f.reshape(B, self.channel, -1) for f in feats_q], axis=-1)

        outputs = {}
        if training:
            pooled_q, _slab_q = box_roi_pool(feats_q, boxes_q, image_size,
                                             feat_cat=featcat_q)
            logits_q = contrast_head(jnp.concatenate(pooled_q), self.w_head_q)

            # momentum update of key encoder (both EMAs in one Pallas launch)
            self.w_bb_k, self.w_head_k = ema_pair(
                self.w_bb_k, self.w_bb_q, self.w_head_k, self.w_head_q, self.m)

            # TODO(synk): _batch_shuffle_ddp / concat_all_gather need
            # torch.distributed; on a single device the shuffle is the identity.
            feats_k = backbone_neck(images_k, self.w_bb_k)
            pooled_k, _slab_k = box_roi_pool(feats_k, boxes_k, image_size)
            logits_k = contrast_head(jnp.concatenate(pooled_k), self.w_head_k)

        # support prototype: ROI pool (mean fused in-kernel), then shot mean
        pooled_s_list, _slab_s = box_roi_pool(feats_s, boxes_s, image_size)
        pooled_s = jnp.concatenate(pooled_s_list)               # (B*S, C)
        box_feats_pool_s = pooled_s.reshape(B, num_shots, -1).mean(axis=1)

        # correlation attention: depthwise 1x1 conv == per-channel scaling,
        # gridded over (B, HWt tiles), both axes parallel
        cor_slab = corattn_all(featcat_q, box_feats_pool_s)
        corattention, off = [], 0
        for f in feats_q:
            Hl, Wl = f.shape[-2], f.shape[-1]
            corattention.append(
                cor_slab[:, :, off:off + Hl * Wl].reshape(B, -1, Hl, Wl))
            off += Hl * Wl

        proposals = rpn_standin(corattention, image_size, boxes_q)
        n_props = proposals[0].shape[0]

        pooled_p, _pred_slab = box_roi_pool(feats_q, proposals, image_size,
                                            feat_cat=featcat_q)
        # TODO(synk): RCNNHead is external; stand-in scores = sigmoid of the
        # similarity with the per-image support prototype (pooled features come
        # straight out of the ROI kernel — no PP re-read).
        pooled_p = jnp.concatenate(pooled_p)                    # (P, C)
        proto = jnp.repeat(box_feats_pool_s, n_props, axis=0)   # (P, C)
        scores = fused_scores(pooled_p, proto, self.channel)[:, 0]
        pred_boxes = proposals
        pred_scores = [scores[i * n_props:(i + 1) * n_props] for i in range(B)]

        if training:
            outputs['loss_rpn'] = jnp.float32(0.0)    # TODO(synk): external RPN loss
            outputs['loss_rcnn'] = jnp.float32(0.0)   # TODO(synk): external RCNN loss
            outputs['contrast_loss'] = contrast_loss(logits_q, logits_k,
                                                     self.queue, self.T)
            # dequeue & enqueue: in-place (aliased) update of D x bs columns only
            bs = logits_k.shape[0]
            assert self.K % bs == 0
            self.queue = enqueue(self.queue, logits_k.T, self.queue_ptr)
            self.queue_ptr = (self.queue_ptr + bs) % self.K

        outputs['pred_boxes'] = pred_boxes
        outputs['pred_scores'] = pred_scores
        return outputs


# ----------------------------------------------------------------------------
# Main
# ----------------------------------------------------------------------------
if __name__ == "__main__":
    root = jax.random.PRNGKey(0)
    model_key, data_key = jax.random.split(root)

    B, num_shots, H, W = 2, 2, 32, 32
    keys = jax.random.split(data_key, B * num_shots + 2 * B)

    def mkimg(k):
        return jax.random.normal(k, (3, H, W), jnp.float32)

    inputs, ki = [], 0
    for b in range(B):
        pool = []
        for s in range(num_shots):
            pool.append({
                'image_s': mkimg(keys[ki]),
                'boxes_s': jnp.array([[3. + b, 4. + s, 24. + b, 22. + s]],
                                     jnp.float32),
            })
            ki += 1
        inputs.append({
            'pool': pool,
            'image_q': mkimg(keys[ki]),
            'image_k': mkimg(keys[ki + 1]),
            'boxes_q': jnp.array([[2., 3., 20., 22.], [5., 6., 28., 27.]],
                                 jnp.float32) + b,
            'boxes_k': jnp.array([[2., 3., 20., 22.], [5., 6., 28., 27.]],
                                 jnp.float32) + b,
        })
        ki += 2

    model = UPRCNNPallas(channel=64, contrast_dim=128, K=256, m=0.999, T=0.07,
                         key=model_key)
    outputs = model.forward(inputs, training=True)
    jax.block_until_ready(outputs)
    print("KERNEL_OK")
</pallas_src>

<mosaic_0001>
module attributes {stable_mosaic.version = 11 : i64} {
  func.func @_proj_kernel(%arg0: i32, %arg1: i32, %arg2: memref<1x8x256xbf16, #tpu.memory_space<vmem>>, %arg3: memref<64x8xbf16, #tpu.memory_space<vmem>>, %arg4: memref<1x64x256xbf16, #tpu.memory_space<vmem>>) attributes {dimension_semantics = [#tpu.dimension_semantics<parallel>, #tpu.dimension_semantics<parallel>], iteration_bounds = array<i64: 4, 1>, scalar_prefetch = 0 : i64, scratch_operands = 0 : i64, tpu.core_type = #tpu.core_type<tc>, window_params = [{transform_indices = @transform_0, window_bounds = array<i64: 1, 8, 256>}, {pipeline_mode = #tpu.pipeline_mode<synchronous>, transform_indices = @transform_1, window_bounds = array<i64: 64, 8>}, {transform_indices = @transform_2, window_bounds = array<i64: 1, 64, 256>}]} {
    %c0 = arith.constant 0 : index
    %c0_0 = arith.constant 0 : index
    %0 = vector.load %arg3[%c0, %c0_0] : memref<64x8xbf16, #tpu.memory_space<vmem>>, vector<64x8xbf16>
    %c0_1 = arith.constant 0 : index
    %c0_2 = arith.constant 0 : index
    %c0_3 = arith.constant 0 : index
    %1 = vector.load %arg2[%c0_1, %c0_2, %c0_3] : memref<1x8x256xbf16, #tpu.memory_space<vmem>>, vector<1x8x256xbf16>
    %2 = vector.shape_cast %1 : vector<1x8x256xbf16> to vector<8x256xbf16>
    %cst = arith.constant dense<0.000000e+00> : vector<64x256xf32>
    %3 = tpu.matmul %0, %2, %cst {dimension_numbers = #tpu.dot_dimension_numbers<[1], [0], [0], [1], [0, 0, 1, 1], [], []>} : vector<64x8xbf16>, vector<8x256xbf16>, vector<64x256xf32> -> vector<64x256xf32>
    %4 = arith.truncf %3 : vector<64x256xf32> to vector<64x256xbf16>
    %c0_4 = arith.constant 0 : index
    %c0_5 = arith.constant 0 : index
    %c0_6 = arith.constant 0 : index
    %5 = vector.load %arg4[%c0_4, %c0_5, %c0_6] : memref<1x64x256xbf16, #tpu.memory_space<vmem>>, vector<1x64x256xbf16>
    %6 = vector.shape_cast %5 : vector<1x64x256xbf16> to vector<64x256xbf16>
    %7 = vector.shape_cast %4 : vector<64x256xbf16> to vector<1x64x256xbf16>
    tpu.vector_store %arg4[%c0_4, %c0_5, %c0_6], %7 {strides = array<i32>} : memref<1x64x256xbf16, #tpu.memory_space<vmem>>, vector<1x64x256xbf16>,
    return
  }
  func.func @transform_0(%arg0: i32, %arg1: i32) -> (i32, i32, i32) {
    %c0_i32 = arith.constant 0 : i32
    %c0_i32_0 = arith.constant 0 : i32
    return %arg0, %c0_i32, %arg1 : i32, i32, i32
  }
  func.func @transform_1(%arg0: i32, %arg1: i32) -> (i32, i32) {
    %c0_i32 = arith.constant 0 : i32
    %c0_i32_0 = arith.constant 0 : i32
    %c0_i32_1 = arith.constant 0 : i32
    return %c0_i32, %c0_i32_0 : i32, i32
  }
  func.func @transform_2(%arg0: i32, %arg1: i32) -> (i32, i32, i32) {
    %c0_i32 = arith.constant 0 : i32
    %c0_i32_0 = arith.constant 0 : i32
    return %arg0, %c0_i32, %arg1 : i32, i32, i32
  }
}

</mosaic_0001>

<llo_original>
// kernel: tpu_custom_call.1
$region0: #{tpu_custom_call.1}
  #allocation0 [shape = 'u32[]', space=smem, size = 0x4, offset = 0x4, fixed_abs, tag = 'smem constant byte address 0x4 - core index']
  #allocation1 [shape = 'u32[144,128]{1,0:T(1,128)}', space=vmem, size = 0x12000, scoped, tag = 'internal scratch']
  %s0 = inlined_call_operand.vmem [shape: bf16[4,8,256], index: 0, kind: input, shape index: {}]
  %s1 = inlined_call_operand.vmem [shape: bf16[64,8], index: 1, kind: input, shape index: {}]
  %s2 = inlined_call_operand.hbm [shape: bf16[4,64,256], index: 2, kind: output, shape index: {}]
  %s3 = sld [smem:[#allocation0]]
  $region41: #{tpu_custom_call.1} parent=0
    _
  %s5 = ssub.s32 1, %s3
  %s6 = scalar_select 0, %s5, %s3
  $region1: #{tpu_custom_call.1} parent=0
    #allocation2 [shape = 'u8[65536]{0}', space=vmem, size = 0x10000, scoped, tag = 'output window, operand 0']
    #allocation3 [shape = 's32[2]{0}', space=sflag, size = 0x8, scoped, tag = 'scoped memory for tpu_custom_call.1']
    %7 = vsyncpa [#allocation3], 0
    %s8 = scalar_lea.sflag [#allocation3], 1
    %9 = vsyncpa %s8, 0
    loop: start=0, step=1, limit=6
    $region2: #{tpu_custom_call.1} parent=1 // loop_pre_header
      _
    $region3: #{tpu_custom_call.1} parent=1 // loop_header
      %s11 = sphi 0, %s15
      %p12 = scmp.ge.s32.totalorder %s11, 6
      %s18 = sphi 0, %s30
      %s19 = sphi 0, %s26
      %s20 = sphi 0, %s18
      %s21 = sphi 0, %s19
      %s22 = sphi 0, %s20
      %s23 = sphi 0, %s21
      %s35 = sphi 0, %s37
      %s38 = sphi 0, %s35
      %s39 = sphi 0, %s38
      %s55 = sphi 0, %s39
      %s59 = sphi 0, %s59
      %s61 = sphi 0, %s59
      %s62 = sphi 0, %s61
      %s76 = sphi 0, %s62
      %s84 = sphi 0, %s86
      %s87 = sphi 0, %s84
      %s88 = sphi 0, %s87
      %s104 = sphi 0, %s88
    $region4: #{tpu_custom_call.1} parent=1 // loop_header_branch
      %14 = sbr.rel (%p12) target = $region8
    $region5: #{tpu_custom_call.1} parent=1 // loop_body
      %s16 = ssub.s32 %s11, 1
      %s17 = ssub.s32 %s11, 2
      %s24 = sadd.s32 1, %s19
      %p25 = scmp.ge.s32.totalorder %s24, 1
      %s26 = scalar_select %p25, 0, %s24
      %s27 = sadd.s32 1, %s18
      %s28 = scalar_select %p25, %s27, %s18
      %p29 = scmp.ge.s32.totalorder %s28, 4
      %s30 = scalar_select %p29, 0, %s28
      %s31 = ssub.s32 %s18, %s30
      %s32 = ssub.s32 %s19, %s26
      %s33 = sor.u32 %s31, %s32
      %p34 = scmp.eq.s32.totalorder %s33, 0
      %s36 = sadd.s32 %s35, 1
      %s37 = scalar_select %p34, %s35, %s36
      %p40 = pneg %p34
      %p41 = scmp.eq.s32.totalorder %s11, 3
      %p42 = por %p40, %p41
      %p43 = scmp.ne.s32.totalorder %s35, %s38
      %p44 = scmp.eq.s32.totalorder %s11, 0
      %p45 = por %p43, %p44
      %p46 = scmp.ne.s32.totalorder %s35, %s38
      %p47 = scmp.eq.s32.totalorder %s16, 3
      %p48 = por %p46, %p47
      %p49 = scmp.ne.s32.totalorder %s38, %s39
      %p50 = scmp.eq.s32.totalorder %s16, 0
      %p51 = por %p49, %p50
      %p52 = scmp.ne.s32.totalorder %s38, %s39
      %p53 = scmp.eq.s32.totalorder %s17, 3
      %p54 = por %p52, %p53
      %p56 = scmp.ne.s32.totalorder %s39, %s55
      %p57 = scmp.eq.s32.totalorder %s17, 0
      %p58 = por %p56, %p57
      %s60 = sadd.s32 %s59, 1
      %p63 = scmp.eq.s32.totalorder %s11, 3
      %p64 = scmp.ne.s32.totalorder %s59, %s61
      %p65 = scmp.eq.s32.totalorder %s11, 0
      %p66 = por %p64, %p65
      %p67 = scmp.ne.s32.totalorder %s59, %s61
      %p68 = scmp.eq.s32.totalorder %s16, 3
      %p69 = por %p67, %p68
      %p70 = scmp.ne.s32.totalorder %s61, %s62
      %p71 = scmp.eq.s32.totalorder %s16, 0
      %p72 = por %p70, %p71
      %p73 = scmp.ne.s32.totalorder %s61, %s62
      %p74 = scmp.eq.s32.totalorder %s17, 3
      %p75 = por %p73, %p74
      %p77 = scmp.ne.s32.totalorder %s62, %s76
      %p78 = scmp.eq.s32.totalorder %s17, 0
      %p79 = por %p77, %p78
      %s80 = ssub.s32 %s18, %s30
      %s81 = ssub.s32 %s19, %s26
      %s82 = sor.u32 %s80, %s81
      %p83 = scmp.eq.s32.totalorder %s82, 0
      %s85 = sadd.s32 %s84, 1
      %s86 = scalar_select %p83, %s84, %s85
      %p89 = pneg %p83
      %p90 = scmp.eq.s32.totalorder %s11, 3
      %p91 = por %p89, %p90
      %p92 = scmp.ne.s32.totalorder %s84, %s87
      %p93 = scmp.eq.s32.totalorder %s11, 0
      %p94 = por %p92, %p93
      %p95 = scmp.ne.s32.totalorder %s84, %s87
      %p96 = scmp.eq.s32.totalorder %s16, 3
      %p97 = por %p95, %p96
      %p98 = scmp.ne.s32.totalorder %s87, %s88
      %p99 = scmp.eq.s32.totalorder %s16, 0
      %p100 = por %p98, %p99
      %p101 = scmp.ne.s32.totalorder %s87, %s88
      %p102 = scmp.eq.s32.totalorder %s17, 3
      %p103 = por %p101, %p102
      %p105 = scmp.ne.s32.totalorder %s88, %s104
      %p106 = scmp.eq.s32.totalorder %s17, 0
      %p107 = por %p105, %p106
      %p108 = scmp.le.s32.totalorder 1, %s11
      %p109 = scmp.lt.s32.totalorder %s11, 5
      %p110 = pnand %p108, %p109
      %p111 = pneg %p110
      // Predicated region
      $region9: #{tpu_custom_call.1} parent=5 // pred_check
        _
      $region10: #{tpu_custom_call.1} parent=5 // pred_check_branch
        %113 = sbr.rel (%p110) target = $region12
      $region11: #{tpu_custom_call.1} parent=5 // pred_region
        %s114 = ssub.s32 %s11, 1
        // Predicated region
        $region13: #{tpu_custom_call.1} parent=11 // pred_check
          %p115 = pneg %p72
        $region14: #{tpu_custom_call.1} parent=11 // pred_check_branch
          %117 = sbr.rel (%p115) target = $region16
        $region15: #{tpu_custom_call.1} parent=11 // pred_region
          _
        $region16: #{tpu_custom_call.1} parent=11 // pred_fallthru
          _
      $region12: #{tpu_custom_call.1} parent=5 // pred_fallthru
        _
      %p118 = scmp.lt.s32.totalorder %s11, 4
      // Predicated region
      $region17: #{tpu_custom_call.1} parent=5 // pred_check
        %p119 = pneg %p118
      $region18: #{tpu_custom_call.1} parent=5 // pred_check_branch
        %121 = sbr.rel (%p119) target = $region20
      $region19: #{tpu_custom_call.1} parent=5 // pred_region
        // Predicated region
        $region21: #{tpu_custom_call.1} parent=19 // pred_check
          %p122 = pneg %p45
        $region22: #{tpu_custom_call.1} parent=19 // pred_check_branch
          %124 = sbr.rel (%p122) target = $region24
        $region23: #{tpu_custom_call.1} parent=19 // pred_region
          %s125 = smul.u32 2, %s19
          %p126 = scmp.lt.s32.totalorder %s18, 3
          %s127 = scalar_select %p126, %s18, 3
          %p128 = scmp.lt.s32.totalorder %s125, 1
          %s129 = scalar_select %p128, %s125, 1
          %s130 = smul.addr %s127, 2
          %s131 = sadd.s32 %s129, %s130
          %s132 = smul.addr %s131, 4
          %s133 = scalar_lea.vmem %s0, %s132
          %s134 = smul.u32 2, %s19
        $region24: #{tpu_custom_call.1} parent=19 // pred_fallthru
          _
      $region20: #{tpu_custom_call.1} parent=5 // pred_fallthru
        _
      %p135 = scmp.le.s32.totalorder 1, %s11
      %p136 = scmp.lt.s32.totalorder %s11, 5
      %p137 = pnand %p135, %p136
      %p138 = pneg %p137
      // Predicated region
      $region25: #{tpu_custom_call.1} parent=5 // pred_check
        _
      $region26: #{tpu_custom_call.1} parent=5 // pred_check_branch
        %140 = sbr.rel (%p137) target = $region28
      $region27: #{tpu_custom_call.1} parent=5 // pred_region
        %s141 = ssub.s32 %s11, 1
        %s142 = smul.u32 2, %s21
        %p143 = scmp.lt.s32.totalorder %s20, 3
        %s144 = scalar_select %p143, %s20, 3
        %p145 = scmp.lt.s32.totalorder %s142, 1
        %s146 = scalar_select %p145, %s142, 1
        %s147 = smul.addr %s144, 2
        %s148 = sadd.s32 %s146, %s147
        %s149 = smul.addr %s148, 4
        %s150 = scalar_lea.vmem %s0, %s149
        %p151 = pneg %p51
        %p152 = pneg %p48
        %p153 = pneg %p72
        %p154 = pneg %p69
        %p155 = pneg %p100
        %p156 = pneg %p97
        %s157 = sand.u32 %s87, 1
        %s158 = scalar_lea.sflag [#allocation3], %s157
        %s159 = sand.u32 %s87, 1
        %s160 = smul.addr %s159, 64
        %s161 = scalar_lea.vmem [#allocation2], %s160
        %s162 = smul.u32 2, %s21
        %p163 = scmp.lt.s32.totalorder %s20, 3
        %s164 = scalar_select %p163, %s20, 3
        %p165 = scmp.lt.s32.totalorder %s162, 1
        %s166 = scalar_select %p165, %s162, 1
        %s167 = smul.addr %s164, 2
        %s168 = sadd.s32 %s166, %s167
        %s169 = smul.addr %s168, 4
        %s170 = scalar_lea.vmem %s0, %s169
        %s171 = smul.u32 2, %s21
        %s172 = smul.u32 2, %s21
        %v174 = vld [vmem:[%s1] sm:$0xf]
        %v175 = vld [vmem:[%s1 + $0x4] sm:$0xf]
        %v176 = vld [vmem:[%s1 + $0x8] sm:$0xf]
        %v177 = vld [vmem:[%s1 + $0xc] sm:$0xf]
        %v178 = vld [vmem:[%s1 + $0x10] sm:$0xf]
        %v179 = vld [vmem:[%s1 + $0x14] sm:$0xf]
        %v180 = vld [vmem:[%s1 + $0x18] sm:$0xf]
        %v181 = vld [vmem:[%s1 + $0x1c] sm:$0xf]
        %v182 = vld [vmem:[%s170] sm:$0xff]
        %v191 = vunpack.c.l.b16 %v174
        %v192 = vunpack.c.l.b16 %v175
        %v193 = vunpack.c.l.b16 %v176
        %v194 = vunpack.c.l.b16 %v177
        %v195 = vunpack.c.l.b16 %v178
        %v196 = vunpack.c.l.b16 %v179
        %v197 = vunpack.c.l.b16 %v180
        %v198 = vunpack.c.l.b16 %v181
        %v199 = vpack.c.b16 %v192, %v191
        %v200 = vpack.c.b16 %v194, %v193
        %v201 = vpack.c.b16 %v196, %v195
        %v202 = vpack.c.b16 %v198, %v197
        %v204 = vunpack.c.l.b16 %v182
        %v205 = vunpack.c.h.b16 %v182
        %v206 = vpack.c.b16 %v204, %v204
        %v207 = vpack.c.b16 %v205, %v205
        %vm208 = vcmask 64512
        %v210 = vsel %vm208, %v199, 0
        %v213 = vsel %vm208, %v200, 0
        %v216 = vsel %vm208, %v201, 0
        %v219 = vsel %vm208, %v202, 0
        %vm221 = vcmask 1043456
        %v223 = vsel %vm221, %v206, 0
        %v226 = vsel %vm221, %v207, 0
        %228 = vmatprep.subr.bf16.mxu0 %v226
        %229 = vmatpush1.bf16.msra.mxu0 %v223
        %230 = vmatprep.subr.bf16.mxu0 0
        %231 = vmatpush1.bf16.msra.mxu0 0
        %232 = vmatprep.subr.bf16.mxu0 0
        %233 = vmatpush1.bf16.msra.mxu0 0
        %234 = vmatprep.subr.bf16.mxu0 0
        %235 = vmatpush1.bf16.msra.mxu0 0
        %236 = vmatprep.subr.bf16.mxu0 0
        %237 = vmatpush1.bf16.msra.mxu0 0
        %238 = vmatprep.subr.bf16.mxu0 0
        %239 = vmatpush1.bf16.msra.mxu0 0
        %240 = vmatprep.subr.bf16.mxu0 0
        %241 = vmatpush1.bf16.msra.mxu0 0
        %242 = vmatprep.subr.bf16.mxu0 0
        %243 = vmatpush1.bf16.msra.mxu0 0
        %244 = vmatprep.subr.bf16.mxu0 0
        %245 = vmatpush1.bf16.msra.mxu0 0
        %246 = vmatprep.subr.bf16.mxu0 0
        %247 = vmatpush1.bf16.msra.mxu0 0
        %248 = vmatprep.subr.bf16.mxu0 0
        %249 = vmatpush1.bf16.msra.mxu0 0
        %250 = vmatprep.subr.bf16.mxu0 0
        %251 = vmatpush1.bf16.msra.mxu0 0
        %252 = vmatprep.subr.bf16.mxu0 0
        %253 = vmatpush1.bf16.msra.mxu0 0
        %254 = vmatprep.subr.bf16.mxu0 0
        %255 = vmatpush1.bf16.msra.mxu0 0
        %256 = vmatprep.subr.bf16.mxu0 0
        %257 = vmatpush1.bf16.msra.mxu0 0
        %258 = vmatprep.subr.bf16.mxu0 0
        %259 = vmatpush1.bf16.msra.mxu0 0
        %260 = vmatprep.mubr.bf16.mxu0 0
        %261 = vmatmul.mubr.bf16.gmra.mrb[0].mxu0 %v210
        %v262 = vpop.f32.mrb[0].mxu0
        %v263 = vadd.f32 0.0, %v262
        %v264 = vpop.f32.mrb[0].mxu0
        %v265 = vadd.f32 0.0, %v264
        %v266 = vpop.f32.mrb[0].mxu0
        %v267 = vadd.f32 0.0, %v266
        %v268 = vpop.f32.mrb[0].mxu0
        %v269 = vadd.f32 0.0, %v268
        %270 = vmatprep.mubr.bf16.mxu0 0
        %271 = vmatmul.mubr.bf16.gmra.mrb[0].mxu0 %v213
        %v272 = vpop.f32.mrb[0].mxu0
        %v273 = vadd.f32 0.0, %v272
        %v274 = vpop.f32.mrb[0].mxu0
        %v275 = vadd.f32 0.0, %v274
        %v276 = vpop.f32.mrb[0].mxu0
        %v277 = vadd.f32 0.0, %v276
        %v278 = vpop.f32.mrb[0].mxu0
        %v279 = vadd.f32 0.0, %v278
        %280 = vmatprep.mubr.bf16.mxu0 0
        %281 = vmatmul.mubr.bf16.gmra.mrb[0].mxu0 %v216
        %v282 = vpop.f32.mrb[0].mxu0
        %v283 = vadd.f32 0.0, %v282
        %v284 = vpop.f32.mrb[0].mxu0
        %v285 = vadd.f32 0.0, %v284
        %v286 = vpop.f32.mrb[0].mxu0
        %v287 = vadd.f32 0.0, %v286
        %v288 = vpop.f32.mrb[0].mxu0
        %v289 = vadd.f32 0.0, %v288
        %290 = vmatprep.mubr.bf16.mxu0 0
        %291 = vmatmul.mubr.bf16.gmra.mrb[0].mxu0 %v219
        %v292 = vpop.f32.mrb[0].mxu0
        %v293 = vadd.f32 0.0, %v292
        %v294 = vpop.f32.mrb[0].mxu0
        %v295 = vadd.f32 0.0, %v294
        %v296 = vpop.f32.mrb[0].mxu0
        %v297 = vadd.f32 0.0, %v296
        %v298 = vpop.f32.mrb[0].mxu0
        %v299 = vadd.f32 0.0, %v298
        %300 = vdwg.mxu0
        %v301 = vpack.c.bf16 %v267, %v263
        %v302 = vpack.c.bf16 %v269, %v265
        %v303 = vpack.c.bf16 %v277, %v273
        %v304 = vpack.c.bf16 %v279, %v275
        %v305 = vpack.c.bf16 %v287, %v283
        %v306 = vpack.c.bf16 %v289, %v285
        %v307 = vpack.c.bf16 %v297, %v293
        %v308 = vpack.c.bf16 %v299, %v295
        %v317 = vunpack.c.l.b16 %v301
        %v318 = vunpack.c.l.b16 %v302
        %v319 = vunpack.c.h.b16 %v301
        %v320 = vunpack.c.h.b16 %v302
        %v321 = vunpack.c.l.b16 %v303
        %v322 = vunpack.c.l.b16 %v304
        %v323 = vunpack.c.h.b16 %v303
        %v324 = vunpack.c.h.b16 %v304
        %v325 = vunpack.c.l.b16 %v305
        %v326 = vunpack.c.l.b16 %v306
        %v327 = vunpack.c.h.b16 %v305
        %v328 = vunpack.c.h.b16 %v306
        %v329 = vunpack.c.l.b16 %v307
        %v330 = vunpack.c.l.b16 %v308
        %v331 = vunpack.c.h.b16 %v307
        %v332 = vunpack.c.h.b16 %v308
        %v333 = vpack.c.b16 %v318, %v317
        %v334 = vpack.c.b16 %v320, %v319
        %v335 = vpack.c.b16 %v322, %v321
        %v336 = vpack.c.b16 %v324, %v323
        %v337 = vpack.c.b16 %v326, %v325
        %v338 = vpack.c.b16 %v328, %v327
        %v339 = vpack.c.b16 %v330, %v329
        %v340 = vpack.c.b16 %v332, %v331
        %349 = vst [vmem:[%s161] sm:$0xff] %v333
        %350 = vst [vmem:[%s161 + $0x8] sm:$0xff] %v334
        %351 = vst [vmem:[%s161 + $0x10] sm:$0xff] %v335
        %352 = vst [vmem:[%s161 + $0x18] sm:$0xff] %v336
        %353 = vst [vmem:[%s161 + $0x20] sm:$0xff] %v337
        %354 = vst [vmem:[%s161 + $0x28] sm:$0xff] %v338
        %355 = vst [vmem:[%s161 + $0x30] sm:$0xff] %v339
        %356 = vst [vmem:[%s161 + $0x38] sm:$0xff] %v340
        %s357 = sand.u32 %s87, 1
        %s358 = scalar_lea.sflag [#allocation3], %s357
        %s359 = sand.u32 %s87, 1
        %s360 = smul.addr %s359, 64
        %s361 = scalar_lea.vmem [#allocation2], %s360
        // Predicated region
        $region29: #{tpu_custom_call.1} parent=27 // pred_check
          %p362 = pneg %p97
        $region30: #{tpu_custom_call.1} parent=27 // pred_check_branch
          %364 = sbr.rel (%p362) target = $region32
        $region31: #{tpu_custom_call.1} parent=27 // pred_region
          %s365 = smul.u32 2, %s21
          %s367 = ssub.s32 1024, 1024
          %368 = vsyncadd %s358, %s367
          %s369 = smul.addr %s20, 16
          %s370 = sadd.s32 %s365, %s369
          %s371 = smul.addr %s370, 64
          %s372 = scalar_lea.hbm %s2, %s371
          %s373 = sshll.u32 %s361, 4
          %s374 = int_to_ptr.vmem [resolvable:$true] %s373
          %379 = dma.vmem_to_hbm [thread:$0]  %s374, 1024, %s372, %s358, 128, 128, 8
        $region32: #{tpu_custom_call.1} parent=27 // pred_fallthru
          _
      $region28: #{tpu_custom_call.1} parent=5 // pred_fallthru
        _
      %p380 = scmp.le.s32.totalorder 2, %s11
      // Predicated region
      $region33: #{tpu_custom_call.1} parent=5 // pred_check
        %p381 = pneg %p380
      $region34: #{tpu_custom_call.1} parent=5 // pred_check_branch
        %383 = sbr.rel (%p381) target = $region36
      $region35: #{tpu_custom_call.1} parent=5 // pred_region
        %s384 = ssub.s32 %s11, 2
        // Predicated region
        $region37: #{tpu_custom_call.1} parent=35 // pred_check
          %p385 = pneg %p103
        $region38: #{tpu_custom_call.1} parent=35 // pred_check_branch
          %387 = sbr.rel (%p385) target = $region40
        $region39: #{tpu_custom_call.1} parent=35 // pred_region
          %s388 = sand.u32 %s88, 1
          %s389 = scalar_lea.sflag [#allocation3], %s388
          %s390 = sand.u32 %s88, 1
          %s391 = smul.addr %s390, 64
          %s392 = scalar_lea.vmem [#allocation2], %s391
          %393 = dma.done %s389, 1024
        $region40: #{tpu_custom_call.1} parent=35 // pred_fallthru
          _
      $region36: #{tpu_custom_call.1} parent=5 // pred_fallthru
        _
    $region6: #{tpu_custom_call.1} parent=1 // loop_footer
      %s15 = sadd.s32 1, %s11
    $region7: #{tpu_custom_call.1} parent=1 // loop_footer_branch
      %10 = sbr.rel target = $region3
    $region8: #{tpu_custom_call.1} parent=1 // loop_exit
      _
    %394 = vsyncpa [#allocation3], 1
    %s395 = scalar_lea.sflag [#allocation3], 1
    %396 = vsyncpa %s395, 1

</llo_original>
